<compile_context>
chip_gen: v7x
topology: tpu7x:2x2x1
jax: 0.10.0
libtpu: 0.0.40
codegen_flags: <defaults>
</compile_context>

<pallas_src>
import jax
import jax.numpy as jnp
from jax.experimental import pallas as pl
from jax.experimental.pallas import tpu as pltpu


# ----------------------------- sizing helpers ------------------------------

def _vmem_capacity_bytes():
    try:
        return int(pltpu.get_tpu_info().vmem_capacity_bytes)
    except Exception:
        return 64 << 20  # conservative (v7x-sized) fallback


def _gen_budgets():
    """Per-generation usable VMEM cap and per-step block byte target."""
    cap = _vmem_capacity_bytes()
    # Leave headroom for Mosaic internal scratch: ~52 MiB usable on v7x
    # (64 MiB physical), ~104 MiB on v5e/v6e (128 MiB physical).
    usable = (cap * 13) // 16
    # Multi-MiB blocks reach ~85% of HBM roofline; keep v7x blocks a bit
    # smaller so 2x-double-buffered in+out (4*block) stays well inside 64 MiB.
    block_target = (12 << 20) if cap >= (96 << 20) else (8 << 20)
    return usable, block_target


def _pick_block_b(B, bytes_per_b, target_bytes, min_steps=4):
    # Biggest Bt whose block is roughly <= target, with >= min_steps grid steps
    # when B allows it (v7x shards the parallel axis across 2 TensorCores, so
    # 4 steps restores per-core double buffering).  Ragged tails are handled
    # with a cdiv grid, so Bt need not divide B.
    bt = max(1, min(B, target_bytes // max(bytes_per_b, 1)))
    if B >= min_steps:
        bt = min(bt, max(1, B // min_steps))
    elif B >= 2:
        bt = min(bt, max(1, B // 2))
    return max(1, bt)


def _pick_hw_tile(HW, bytes_per_row, target_bytes):
    # Largest hw_t that divides HW, is a multiple of 8 (sublane) or equals HW,
    # and keeps hw_t * bytes_per_row roughly <= target.
    want = max(1, target_bytes // max(bytes_per_row, 1))
    if want >= HW:
        return HW
    t = min(want, HW)
    t -= t % 8
    while t >= 8:
        if HW % t == 0:
            return t
        t -= 8
    # TODO(synk): no multiple-of-8 divisor (rare for conv maps); fall back to
    # the full spatial extent instead of a masked ragged tail.
    return HW


# --------------------------------- kernels ---------------------------------

def _se_fused_kernel(x_ref, w1t_ref, w2t_ref, o_ref):
    """Single pass: squeeze + excitation + scale on one (Bt, HW, C) block."""
    # Squeeze: global average pool over spatial (sublane/XLU reduction), f32 acc.
    y = jnp.mean(x_ref[...].astype(jnp.float32), axis=1)                   # (Bt, C)

    # Excitation: fc1 -> ReLU -> fc2 -> Sigmoid (tiny MXU/EUP work; hidden dim
    # zero-padded to a lane multiple, mathematically exact).
    h = jnp.maximum(jnp.dot(y, w1t_ref[...],
                            preferred_element_type=jnp.float32), 0.0)      # (Bt, Crp)
    s = jax.nn.sigmoid(jnp.dot(h, w2t_ref[...],
                               preferred_element_type=jnp.float32))        # (Bt, C)

    # Scale: re-read x so the store streams VMEM->VPU->VMEM instead of keeping
    # the whole tile live across the excitation chain.  For sub-f32 activations
    # do the rescale in the native dtype (halves vld/vst/VALU traffic on the
    # dominant streaming pass); the squeeze already accumulated in f32.
    if o_ref.dtype == jnp.float32:
        o_ref[...] = x_ref[...] * s[:, None, :]
    else:
        o_ref[...] = x_ref[...] * s[:, None, :].astype(o_ref.dtype)


def _se_pool_kernel(x_ref, sum_ref):
    """Two-pass stage 1: accumulate per-channel sums over HW tiles."""
    # x_ref: (Bt, hw_t, C); sum_ref: (Bt, 1, C) f32, resident across the hw axis.
    hw = pl.program_id(1)

    @pl.when(hw == 0)
    def _():
        sum_ref[...] = jnp.zeros_like(sum_ref)

    sum_ref[...] += jnp.sum(x_ref[...].astype(jnp.float32), axis=1, keepdims=True)


def _se_scale_kernel(x_ref, s_ref, o_ref):
    """Two-pass stage 2: out = x * s (s broadcast over the spatial axis)."""
    s = s_ref[...]                                   # (Bt, 1, C) f32
    if o_ref.dtype == jnp.float32:
        o_ref[...] = x_ref[...] * s
    else:
        o_ref[...] = x_ref[...] * s.astype(o_ref.dtype)


# --------------------------------- wrappers ---------------------------------

def _se_single_pass(x, w1t, w2t, bt, vmem_bytes):
    B, HW, C = x.shape
    crp = w1t.shape[1]
    nb = pl.cdiv(B, bt)
    return pl.pallas_call(
        _se_fused_kernel,
        out_shape=jax.ShapeDtypeStruct((B, HW, C), x.dtype),
        grid_spec=pltpu.PrefetchScalarGridSpec(
            num_scalar_prefetch=0,
            grid=(nb,),
            in_specs=[
                pl.BlockSpec((bt, HW, C), lambda b: (b, 0, 0)),
                pl.BlockSpec((C, crp), lambda b: (0, 0)),
                pl.BlockSpec((crp, C), lambda b: (0, 0)),
            ],
            out_specs=pl.BlockSpec((bt, HW, C), lambda b: (b, 0, 0)),
        ),
        compiler_params=pltpu.CompilerParams(
            dimension_semantics=("parallel",),
            vmem_limit_bytes=vmem_bytes,
        ),
    )(x, w1t, w2t)


def _se_two_pass(x, w1t, w2t, bt, hw_t, vmem_bytes):
    B, HW, C = x.shape
    nb = pl.cdiv(B, bt)
    nh = HW // hw_t  # hw_t chosen as an exact divisor of HW

    pooled_sum = pl.pallas_call(
        _se_pool_kernel,
        out_shape=jax.ShapeDtypeStruct((B, 1, C), jnp.float32),
        grid_spec=pltpu.PrefetchScalarGridSpec(
            num_scalar_prefetch=0,
            grid=(nb, nh),
            in_specs=[pl.BlockSpec((bt, hw_t, C), lambda b, h: (b, h, 0))],
            out_specs=pl.BlockSpec((bt, 1, C), lambda b, h: (b, 0, 0)),
        ),
        compiler_params=pltpu.CompilerParams(
            dimension_semantics=("parallel", "arbitrary"),
            vmem_limit_bytes=vmem_bytes,
        ),
    )(x)

    # Excitation on the tiny (B, C) pooled tensor: negligible HBM traffic, so
    # run it as plain XLA between the two streaming passes.
    y = pooled_sum[:, 0, :] * (1.0 / HW)
    h = jnp.maximum(y @ w1t, 0.0)
    s = jax.nn.sigmoid(h @ w2t)[:, None, :]          # (B, 1, C) f32

    return pl.pallas_call(
        _se_scale_kernel,
        out_shape=jax.ShapeDtypeStruct((B, HW, C), x.dtype),
        grid_spec=pltpu.PrefetchScalarGridSpec(
            num_scalar_prefetch=0,
            grid=(nb, nh),
            in_specs=[
                pl.BlockSpec((bt, hw_t, C), lambda b, h: (b, h, 0)),
                pl.BlockSpec((bt, 1, C), lambda b, h: (b, 0, 0)),
            ],
            out_specs=pl.BlockSpec((bt, hw_t, C), lambda b, h: (b, h, 0)),
        ),
        compiler_params=pltpu.CompilerParams(
            dimension_semantics=("parallel", "parallel"),
            vmem_limit_bytes=vmem_bytes,
        ),
    )(x, s)


def se_block_nhwc_flat(x_bhwc, w1, w2, *, block_b=None, block_target_bytes=None,
                       two_pass=None):
    """Core entry. x_bhwc: (B, HW, C); w1: (Cr, C); w2: (C, Cr) (torch Linear layout)."""
    B, HW, C = x_bhwc.shape
    Cr = w1.shape[0]
    assert w1.shape == (Cr, C) and w2.shape == (C, Cr)

    usable_vmem, default_target = _gen_budgets()
    target = block_target_bytes if block_target_bytes is not None else default_target

    # Zero-pad the tiny hidden dim up to a lane multiple (exact: padded fc1
    # outputs are 0 and padded fc2 rows contribute 0).
    crp = max(128, -(-Cr // 128) * 128)
    w1t = jnp.zeros((C, crp), jnp.float32).at[:, :Cr].set(
        jnp.transpose(w1).astype(jnp.float32))
    w2t = jnp.zeros((crp, C), jnp.float32).at[:Cr, :].set(
        jnp.transpose(w2).astype(jnp.float32))

    bytes_per_b = HW * C * x_bhwc.dtype.itemsize
    weight_bytes = 2 * crp * C * 4
    headroom = 2 << 20

    if two_pass is None:
        # Single pass needs at least one full (1, HW, C) block double-buffered
        # for input and output within this generation's usable VMEM.
        two_pass = (4 * bytes_per_b + weight_bytes + headroom) > usable_vmem

    if not two_pass:
        bt = block_b if block_b is not None else _pick_block_b(
            B, bytes_per_b, target, min_steps=4)
        need = 4 * bt * bytes_per_b + weight_bytes + headroom
        # Never silently under-provision an explicit block_b; auto-picked
        # blocks always fit the per-generation usable budget.
        vmem_bytes = int(max(32 << 20,
                             min(need, usable_vmem) if block_b is None else need))
        return _se_single_pass(x_bhwc, w1t, w2t, bt, vmem_bytes)

    # Two-pass (HW-tiled) path: keeps tiles in the multi-MiB sweet spot even
    # when a single batch element is larger than the VMEM budget.
    bt = block_b if block_b is not None else 1
    row_bytes = C * x_bhwc.dtype.itemsize
    hw_t = _pick_hw_tile(HW, bt * row_bytes, target)
    need = 4 * bt * hw_t * row_bytes + 4 * bt * C * 4 + headroom
    vmem_bytes = int(max(32 << 20, min(need, usable_vmem)))
    return _se_two_pass(x_bhwc, w1t, w2t, bt, hw_t, vmem_bytes)


def se_block(x_nchw, w1, w2, **kw):
    """PyTorch-layout entry point. x_nchw: (B, C, H, W); w1: (Cr, C); w2: (C, Cr)."""
    B, C, H, W = x_nchw.shape
    # NOTE: these transposes are layout plumbing to match the PyTorch module;
    # each is a full extra HBM read+write pass in XLA.  Production TPU models
    # should keep activations NHWC end-to-end and call se_block_nhwc_flat
    # directly (or fuse the SE scale into the adjacent conv epilogue).
    x = jnp.transpose(x_nchw.reshape(B, C, H * W), (0, 2, 1))
    out = se_block_nhwc_flat(x, w1, w2, **kw)
    return jnp.transpose(out, (0, 2, 1)).reshape(B, C, H, W)


def se_block_ref(x_nchw, w1, w2):
    """Pure-JAX reference mirroring the PyTorch forward (bias-free Linears)."""
    y = jnp.mean(x_nchw.astype(jnp.float32), axis=(2, 3))          # (B, C)
    y = jnp.maximum(y @ w1.T.astype(jnp.float32), 0.0)             # (B, Cr)
    y = jax.nn.sigmoid(y @ w2.T.astype(jnp.float32))               # (B, C)
    return (x_nchw.astype(jnp.float32) * y[:, :, None, None]).astype(x_nchw.dtype)


if __name__ == "__main__":
    # Small deterministic shapes: channel=32, reduction=16 -> hidden=2.
    B, C, H, W = 2, 32, 8, 8
    reduction = 16
    Cr = C // reduction

    key = jax.random.PRNGKey(0)
    kx, k1, k2 = jax.random.split(key, 3)

    x = jax.random.normal(kx, (B, C, H, W), dtype=jnp.float32)
    # Linear weights (PyTorch layout: (out_features, in_features), no bias).
    w1 = jax.random.normal(k1, (Cr, C), dtype=jnp.float32) * 0.1
    w2 = jax.random.normal(k2, (C, Cr), dtype=jnp.float32) * 0.1

    ref = jax.block_until_ready(se_block_ref(x, w1, w2))

    # 1) Fused single-pass path (default for typical SE feature-map sizes).
    out1 = jax.block_until_ready(se_block(x, w1, w2))
    assert out1.shape == (B, C, H, W)
    assert jnp.allclose(out1, ref, atol=1e-5, rtol=1e-5), "single-pass mismatch"

    # 2) Two-pass (HW-tiled) path, as auto-selected when a single batch element
    #    no longer fits the per-generation VMEM budget (forced here for test).
    out2 = jax.block_until_ready(se_block(x, w1, w2, two_pass=True))
    assert jnp.allclose(out2, ref, atol=1e-5, rtol=1e-5), "two-pass mismatch"

    # 3) bf16 activations exercise the low-precision rescale path.
    xb = x.astype(jnp.bfloat16)
    refb = jax.block_until_ready(se_block_ref(xb, w1, w2))
    outb = jax.block_until_ready(se_block(xb, w1, w2))
    assert jnp.allclose(outb.astype(jnp.float32), refb.astype(jnp.float32),
                        atol=3e-2, rtol=3e-2), "bf16 mismatch"

    print("KERNEL_OK")
</pallas_src>

<mosaic_0001>
module attributes {stable_mosaic.version = 11 : i64} {
  func.func @_se_fused_kernel(%arg0: i32, %arg1: memref<1x64x32xf32, #tpu.memory_space<vmem>>, %arg2: memref<32x128xf32, #tpu.memory_space<vmem>>, %arg3: memref<128x32xf32, #tpu.memory_space<vmem>>, %arg4: memref<1x64x32xf32, #tpu.memory_space<vmem>>) attributes {dimension_semantics = [#tpu.dimension_semantics<parallel>], iteration_bounds = array<i64: 2>, scalar_prefetch = 0 : i64, scratch_operands = 0 : i64, tpu.core_type = #tpu.core_type<tc>, window_params = [{transform_indices = @transform_0, window_bounds = array<i64: 1, 64, 32>}, {pipeline_mode = #tpu.pipeline_mode<synchronous>, transform_indices = @transform_1, window_bounds = array<i64: 32, 128>}, {pipeline_mode = #tpu.pipeline_mode<synchronous>, transform_indices = @transform_2, window_bounds = array<i64: 128, 32>}, {transform_indices = @transform_3, window_bounds = array<i64: 1, 64, 32>}]} {
    %c0 = arith.constant 0 : index
    %c0_0 = arith.constant 0 : index
    %c0_1 = arith.constant 0 : index
    %0 = vector.load %arg1[%c0, %c0_0, %c0_1] : memref<1x64x32xf32, #tpu.memory_space<vmem>>, vector<1x64x32xf32>
    %cst = arith.constant dense<0.000000e+00> : vector<1x32xf32>
    %1 = vector.multi_reduction <add>, %0, %cst [1] : vector<1x64x32xf32> to vector<1x32xf32>
    %cst_2 = arith.constant 6.400000e+01 : f32
    %2 = vector.broadcast %cst_2 : f32 to vector<1x32xf32>
    %3 = arith.divf %1, %2 : vector<1x32xf32>
    %c0_3 = arith.constant 0 : index
    %c0_4 = arith.constant 0 : index
    %4 = vector.load %arg2[%c0_3, %c0_4] : memref<32x128xf32, #tpu.memory_space<vmem>>, vector<32x128xf32>
    %cst_5 = arith.constant dense<0.000000e+00> : vector<1x128xf32>
    %5 = tpu.matmul %3, %4, %cst_5 {dimension_numbers = #tpu.dot_dimension_numbers<[1], [0], [0], [1], [0, 0, 1, 1], [], []>} : vector<1x32xf32>, vector<32x128xf32>, vector<1x128xf32> -> vector<1x128xf32>
    %cst_6 = arith.constant 0.000000e+00 : f32
    %6 = vector.broadcast %cst_6 : f32 to vector<1x128xf32>
    %7 = arith.maximumf %5, %6 : vector<1x128xf32>
    %c0_7 = arith.constant 0 : index
    %c0_8 = arith.constant 0 : index
    %8 = vector.load %arg3[%c0_7, %c0_8] : memref<128x32xf32, #tpu.memory_space<vmem>>, vector<128x32xf32>
    %cst_9 = arith.constant dense<0.000000e+00> : vector<1x32xf32>
    %9 = tpu.matmul %7, %8, %cst_9 {dimension_numbers = #tpu.dot_dimension_numbers<[1], [0], [0], [1], [0, 0, 1, 1], [], []>} : vector<1x128xf32>, vector<128x32xf32>, vector<1x32xf32> -> vector<1x32xf32>
    %10 = arith.negf %9 : vector<1x32xf32>
    %11 = math.exp %10 : vector<1x32xf32>
    %cst_10 = arith.constant 1.000000e+00 : f32
    %12 = vector.broadcast %cst_10 : f32 to vector<1x32xf32>
    %13 = arith.addf %12, %11 : vector<1x32xf32>
    %14 = arith.divf %12, %13 : vector<1x32xf32>
    %c0_11 = arith.constant 0 : index
    %c0_12 = arith.constant 0 : index
    %c0_13 = arith.constant 0 : index
    %15 = vector.load %arg1[%c0_11, %c0_12, %c0_13] : memref<1x64x32xf32, #tpu.memory_space<vmem>>, vector<1x64x32xf32>
    %16 = vector.shape_cast %14 : vector<1x32xf32> to vector<1x1x32xf32>
    %17 = vector.broadcast %16 : vector<1x1x32xf32> to vector<1x64x32xf32>
    %18 = arith.mulf %15, %17 : vector<1x64x32xf32>
    %c0_14 = arith.constant 0 : index
    %c0_15 = arith.constant 0 : index
    %c0_16 = arith.constant 0 : index
    %19 = vector.load %arg4[%c0_14, %c0_15, %c0_16] : memref<1x64x32xf32, #tpu.memory_space<vmem>>, vector<1x64x32xf32>
    tpu.vector_store %arg4[%c0_14, %c0_15, %c0_16], %18 {strides = array<i32>} : memref<1x64x32xf32, #tpu.memory_space<vmem>>, vector<1x64x32xf32>,
    return
  }
  func.func @transform_0(%arg0: i32) -> (i32, i32, i32) {
    %c0_i32 = arith.constant 0 : i32
    %c0_i32_0 = arith.constant 0 : i32
    %c0_i32_1 = arith.constant 0 : i32
    return %arg0, %c0_i32, %c0_i32_0 : i32, i32, i32
  }
  func.func @transform_1(%arg0: i32) -> (i32, i32) {
    %c0_i32 = arith.constant 0 : i32
    %c0_i32_0 = arith.constant 0 : i32
    %c0_i32_1 = arith.constant 0 : i32
    return %c0_i32, %c0_i32_0 : i32, i32
  }
  func.func @transform_2(%arg0: i32) -> (i32, i32) {
    %c0_i32 = arith.constant 0 : i32
    %c0_i32_0 = arith.constant 0 : i32
    %c0_i32_1 = arith.constant 0 : i32
    return %c0_i32, %c0_i32_0 : i32, i32
  }
  func.func @transform_3(%arg0: i32) -> (i32, i32, i32) {
    %c0_i32 = arith.constant 0 : i32
    %c0_i32_0 = arith.constant 0 : i32
    %c0_i32_1 = arith.constant 0 : i32
    return %arg0, %c0_i32, %c0_i32_0 : i32, i32, i32
  }
}

</mosaic_0001>

<llo_original>
// kernel: tpu_custom_call.1
$region0: #{tpu_custom_call.1}
  #allocation0 [shape = 'u32[]', space=smem, size = 0x4, offset = 0x4, fixed_abs, tag = 'smem constant byte address 0x4 - core index']
  #allocation1 [shape = 'u32[144,128]{1,0:T(1,128)}', space=vmem, size = 0x12000, scoped, tag = 'internal scratch']
  %s0 = inlined_call_operand.vmem [shape: f32[2,64,32], index: 0, kind: input, shape index: {}]
  %s1 = inlined_call_operand.vmem [shape: f32[32,128], index: 1, kind: input, shape index: {}]
  %s2 = inlined_call_operand.vmem [shape: f32[128,32], index: 2, kind: input, shape index: {}]
  %s3 = inlined_call_operand.vmem [shape: f32[2,64,32], index: 3, kind: output, shape index: {}]
  %s4 = sld [smem:[#allocation0]]
  $region45: #{tpu_custom_call.1} parent=0
    _
  %s6 = ssub.s32 1, %s4
  %s7 = scalar_select 0, %s6, %s4
  loop: start=0, step=1, limit=4
  $region2: #{tpu_custom_call.1} parent=0 // loop_pre_header
    _
  $region3: #{tpu_custom_call.1} parent=0 // loop_header
    %s9 = sphi 0, %s13
    %p10 = scmp.ge.s32.totalorder %s9, 4
    %s19 = sphi 0, %s21
    %s22 = sphi 0, %s19
    %s23 = sphi 0, %s22
    %s39 = sphi 0, %s23
    %s43 = sphi 0, %s43
    %s45 = sphi 0, %s43
    %s46 = sphi 0, %s45
    %s60 = sphi 0, %s46
    %s64 = sphi 0, %s64
    %s66 = sphi 0, %s64
    %s67 = sphi 0, %s66
    %s81 = sphi 0, %s67
    %s87 = sphi 0, %s89
    %s90 = sphi 0, %s87
    %s91 = sphi 0, %s90
    %s107 = sphi 0, %s91
  $region4: #{tpu_custom_call.1} parent=0 // loop_header_branch
    %12 = sbr.rel (%p10) target = $region8
  $region5: #{tpu_custom_call.1} parent=0 // loop_body
    %s14 = ssub.s32 %s9, 1
    %s15 = ssub.s32 %s9, 2
    %s16 = sadd.s32 %s9, 1
    %s17 = ssub.s32 %s9, %s16
    %p18 = scmp.eq.s32.totalorder %s17, 0
    %s20 = sadd.s32 %s19, 1
    %s21 = scalar_select %p18, %s19, %s20
    %p24 = pneg %p18
    %p25 = scmp.eq.s32.totalorder %s9, 1
    %p26 = por %p24, %p25
    %p27 = scmp.ne.s32.totalorder %s19, %s22
    %p28 = scmp.eq.s32.totalorder %s9, 0
    %p29 = por %p27, %p28
    %p30 = scmp.ne.s32.totalorder %s19, %s22
    %p31 = scmp.eq.s32.totalorder %s14, 1
    %p32 = por %p30, %p31
    %p33 = scmp.ne.s32.totalorder %s22, %s23
    %p34 = scmp.eq.s32.totalorder %s14, 0
    %p35 = por %p33, %p34
    %p36 = scmp.ne.s32.totalorder %s22, %s23
    %p37 = scmp.eq.s32.totalorder %s15, 1
    %p38 = por %p36, %p37
    %p40 = scmp.ne.s32.totalorder %s23, %s39
    %p41 = scmp.eq.s32.totalorder %s15, 0
    %p42 = por %p40, %p41
    %s44 = sadd.s32 %s43, 1
    %p47 = scmp.eq.s32.totalorder %s9, 1
    %p48 = scmp.ne.s32.totalorder %s43, %s45
    %p49 = scmp.eq.s32.totalorder %s9, 0
    %p50 = por %p48, %p49
    %p51 = scmp.ne.s32.totalorder %s43, %s45
    %p52 = scmp.eq.s32.totalorder %s14, 1
    %p53 = por %p51, %p52
    %p54 = scmp.ne.s32.totalorder %s45, %s46
    %p55 = scmp.eq.s32.totalorder %s14, 0
    %p56 = por %p54, %p55
    %p57 = scmp.ne.s32.totalorder %s45, %s46
    %p58 = scmp.eq.s32.totalorder %s15, 1
    %p59 = por %p57, %p58
    %p61 = scmp.ne.s32.totalorder %s46, %s60
    %p62 = scmp.eq.s32.totalorder %s15, 0
    %p63 = por %p61, %p62
    %s65 = sadd.s32 %s64, 1
    %p68 = scmp.eq.s32.totalorder %s9, 1
    %p69 = scmp.ne.s32.totalorder %s64, %s66
    %p70 = scmp.eq.s32.totalorder %s9, 0
    %p71 = por %p69, %p70
    %p72 = scmp.ne.s32.totalorder %s64, %s66
    %p73 = scmp.eq.s32.totalorder %s14, 1
    %p74 = por %p72, %p73
    %p75 = scmp.ne.s32.totalorder %s66, %s67
    %p76 = scmp.eq.s32.totalorder %s14, 0
    %p77 = por %p75, %p76
    %p78 = scmp.ne.s32.totalorder %s66, %s67
    %p79 = scmp.eq.s32.totalorder %s15, 1
    %p80 = por %p78, %p79
    %p82 = scmp.ne.s32.totalorder %s67, %s81
    %p83 = scmp.eq.s32.totalorder %s15, 0
    %p84 = por %p82, %p83
    %s85 = ssub.s32 %s9, %s16
    %p86 = scmp.eq.s32.totalorder %s85, 0
    %s88 = sadd.s32 %s87, 1
    %s89 = scalar_select %p86, %s87, %s88
    %p92 = pneg %p86
    %p93 = scmp.eq.s32.totalorder %s9, 1
    %p94 = por %p92, %p93
    %p95 = scmp.ne.s32.totalorder %s87, %s90
    %p96 = scmp.eq.s32.totalorder %s9, 0
    %p97 = por %p95, %p96
    %p98 = scmp.ne.s32.totalorder %s87, %s90
    %p99 = scmp.eq.s32.totalorder %s14, 1
    %p100 = por %p98, %p99
    %p101 = scmp.ne.s32.totalorder %s90, %s91
    %p102 = scmp.eq.s32.totalorder %s14, 0
    %p103 = por %p101, %p102
    %p104 = scmp.ne.s32.totalorder %s90, %s91
    %p105 = scmp.eq.s32.totalorder %s15, 1
    %p106 = por %p104, %p105
    %p108 = scmp.ne.s32.totalorder %s91, %s107
    %p109 = scmp.eq.s32.totalorder %s15, 0
    %p110 = por %p108, %p109
    %p111 = scmp.le.s32.totalorder 1, %s9
    %p112 = scmp.lt.s32.totalorder %s9, 3
    %p113 = pnand %p111, %p112
    %p114 = pneg %p113
    // Predicated region
    $region9: #{tpu_custom_call.1} parent=5 // pred_check
      _
    $region10: #{tpu_custom_call.1} parent=5 // pred_check_branch
      %116 = sbr.rel (%p113) target = $region12
    $region11: #{tpu_custom_call.1} parent=5 // pred_region
      %s117 = ssub.s32 %s9, 1
      // Predicated region
      $region13: #{tpu_custom_call.1} parent=11 // pred_check
        %p118 = pneg %p56
      $region14: #{tpu_custom_call.1} parent=11 // pred_check_branch
        %120 = sbr.rel (%p118) target = $region16
      $region15: #{tpu_custom_call.1} parent=11 // pred_region
        _
      $region16: #{tpu_custom_call.1} parent=11 // pred_fallthru
        _
      // Predicated region
      $region17: #{tpu_custom_call.1} parent=11 // pred_check
        %p121 = pneg %p77
      $region18: #{tpu_custom_call.1} parent=11 // pred_check_branch
        %123 = sbr.rel (%p121) target = $region20
      $region19: #{tpu_custom_call.1} parent=11 // pred_region
        _
      $region20: #{tpu_custom_call.1} parent=11 // pred_fallthru
        _
    $region12: #{tpu_custom_call.1} parent=5 // pred_fallthru
      _
    %p124 = scmp.lt.s32.totalorder %s9, 2
    // Predicated region
    $region21: #{tpu_custom_call.1} parent=5 // pred_check
      %p125 = pneg %p124
    $region22: #{tpu_custom_call.1} parent=5 // pred_check_branch
      %127 = sbr.rel (%p125) target = $region24
    $region23: #{tpu_custom_call.1} parent=5 // pred_region
      // Predicated region
      $region25: #{tpu_custom_call.1} parent=23 // pred_check
        %p128 = pneg %p29
      $region26: #{tpu_custom_call.1} parent=23 // pred_check_branch
        %130 = sbr.rel (%p128) target = $region28
      $region27: #{tpu_custom_call.1} parent=23 // pred_region
        %p131 = scmp.lt.s32.totalorder %s9, 1
        %s132 = scalar_select %p131, %s9, 1
        %s133 = smul.addr %s132, 8
        %s134 = smul.addr %s133, 8
        %s135 = scalar_lea.vmem %s0, %s134
      $region28: #{tpu_custom_call.1} parent=23 // pred_fallthru
        _
    $region24: #{tpu_custom_call.1} parent=5 // pred_fallthru
      _
    %p136 = scmp.le.s32.totalorder 1, %s9
    %p137 = scmp.lt.s32.totalorder %s9, 3
    %p138 = pnand %p136, %p137
    %p139 = pneg %p138
    // Predicated region
    $region29: #{tpu_custom_call.1} parent=5 // pred_check
      _
    $region30: #{tpu_custom_call.1} parent=5 // pred_check_branch
      %141 = sbr.rel (%p138) target = $region32
    $region31: #{tpu_custom_call.1} parent=5 // pred_region
      %s142 = ssub.s32 %s9, 1
      %p143 = scmp.lt.s32.totalorder %s14, 1
      %s144 = scalar_select %p143, %s14, 1
      %s145 = smul.addr %s144, 8
      %s146 = smul.addr %s145, 8
      %s147 = scalar_lea.vmem %s0, %s146
      %p148 = pneg %p35
      %p149 = pneg %p32
      %p150 = pneg %p56
      %p151 = pneg %p53
      %p152 = pneg %p77
      %p153 = pneg %p74
      %p154 = pneg %p103
      %p155 = pneg %p100
      %p156 = scmp.lt.s32.totalorder %s14, 1
      %s157 = scalar_select %p156, %s14, 1
      %s158 = smul.addr %s157, 8
      %s159 = smul.addr %s158, 8
      %s160 = scalar_lea.vmem %s3, %s159
      %p161 = scmp.lt.s32.totalorder %s14, 1
      %s162 = scalar_select %p161, %s14, 1
      %s163 = smul.addr %s162, 8
      %s164 = smul.addr %s163, 8
      %s165 = scalar_lea.vmem %s0, %s164
      %p166 = scmp.lt.s32.totalorder %s14, 1
      %s167 = scalar_select %p166, %s14, 1
      %s168 = smul.addr %s167, 8
      %s169 = smul.addr %s168, 8
      %s170 = scalar_lea.vmem %s3, %s169
      %v171 = vld [vmem:[%s165] sm:$0xff]
      %v172 = vld [vmem:[%s165 + $0x8] sm:$0xff]
      %v173 = vld [vmem:[%s165 + $0x10] sm:$0xff]
      %v174 = vld [vmem:[%s165 + $0x18] sm:$0xff]
      %v175 = vld [vmem:[%s165 + $0x20] sm:$0xff]
      %v176 = vld [vmem:[%s165 + $0x28] sm:$0xff]
      %v177 = vld [vmem:[%s165 + $0x30] sm:$0xff]
      %v178 = vld [vmem:[%s165 + $0x38] sm:$0xff]
      %vm179 = vcmask 261120
      %v180 = vsel %vm179, %v171, 0.0
      %v181 = vsel %vm179, %v172, 0.0
      %v182 = vadd.f32 %v180, %v181
      %v183 = vsel %vm179, %v173, 0.0
      %v184 = vadd.f32 %v182, %v183
      %v185 = vsel %vm179, %v174, 0.0
      %v186 = vadd.f32 %v184, %v185
      %v187 = vsel %vm179, %v175, 0.0
      %v188 = vadd.f32 %v186, %v187
      %v189 = vsel %vm179, %v176, 0.0
      %v190 = vadd.f32 %v188, %v189
      %v191 = vsel %vm179, %v177, 0.0
      %v192 = vadd.f32 %v190, %v191
      %v193 = vsel %vm179, %v178, 0.0
      %v194 = vadd.f32 %v192, %v193
      %v195 = vrot.slane %v194, 4
      %v196 = vadd.f32 %v194, %v195
      %v197 = vrot.slane %v196, 2
      %v198 = vadd.f32 %v196, %v197
      %v199 = vrot.slane %v198, 1
      %v200 = vadd.f32 %v198, %v199
      %v201 = vrcp.pop 64.0
      %v202 = vmul.f32 %v200, %v201
      %v203 = vld [vmem:[%s1] sm:$0xff]
      %v204 = vld [vmem:[%s1 + $0x8] sm:$0xff]
      %v205 = vld [vmem:[%s1 + $0x10] sm:$0xff]
      %v206 = vld [vmem:[%s1 + $0x18] sm:$0xff]
      %v208 = vsel %vm179, %v202, 0
      %210 = vmatprep.subr.mxu0 0.0
      %211 = vmatpush1.msra.mxu0 %v203
      %212 = vmatprep.subr.mxu0 0.0
      %213 = vmatpush1.msra.mxu0 %v204
      %214 = vmatprep.subr.mxu0 0.0
      %215 = vmatpush1.msra.mxu0 %v205
      %216 = vmatprep.subr.mxu0 0.0
      %217 = vmatpush1.msra.mxu0 %v206
      %218 = vmatprep.subr.mxu0 0.0
      %219 = vmatpush1.msra.mxu0 0.0
      %220 = vmatprep.subr.mxu0 0.0
      %221 = vmatpush1.msra.mxu0 0.0
      %222 = vmatprep.subr.mxu0 0.0
      %223 = vmatpush1.msra.mxu0 0.0
      %224 = vmatprep.subr.mxu0 0.0
      %225 = vmatpush1.msra.mxu0 0.0
      %226 = vmatprep.subr.mxu0 0.0
      %227 = vmatpush1.msra.mxu0 0.0
      %228 = vmatprep.subr.mxu0 0.0
      %229 = vmatpush1.msra.mxu0 0.0
      %230 = vmatprep.subr.mxu0 0.0
      %231 = vmatpush1.msra.mxu0 0.0
      %232 = vmatprep.subr.mxu0 0.0
      %233 = vmatpush1.msra.mxu0 0.0
      %234 = vmatprep.subr.mxu0 0.0
      %235 = vmatpush1.msra.mxu0 0.0
      %236 = vmatprep.subr.mxu0 0.0
      %237 = vmatpush1.msra.mxu0 0.0
      %238 = vmatprep.subr.mxu0 0.0
      %239 = vmatpush1.msra.mxu0 0.0
      %240 = vmatprep.subr.mxu0 0.0
      %241 = vmatpush1.msra.mxu0 0.0
      %242 = vmatprep.subr.mxu0 0.0
      %243 = vmatpush1.msra.mxu0 0.0
      %244 = vmatprep.subr.mxu0 0.0
      %245 = vmatpush1.msra.mxu0 0.0
      %246 = vmatprep.subr.mxu0 0.0
      %247 = vmatpush1.msra.mxu0 0.0
      %248 = vmatprep.subr.mxu0 0.0
      %249 = vmatpush1.msra.mxu0 0.0
      %250 = vmatprep.subr.mxu0 0.0
      %251 = vmatpush1.msra.mxu0 0.0
      %252 = vmatprep.subr.mxu0 0.0
      %253 = vmatpush1.msra.mxu0 0.0
      %254 = vmatprep.subr.mxu0 0.0
      %255 = vmatpush1.msra.mxu0 0.0
      %256 = vmatprep.subr.mxu0 0.0
      %257 = vmatpush1.msra.mxu0 0.0
      %258 = vmatprep.subr.mxu0 0.0
      %259 = vmatpush1.msra.mxu0 0.0
      %260 = vmatprep.subr.mxu0 0.0
      %261 = vmatpush1.msra.mxu0 0.0
      %262 = vmatprep.subr.mxu0 0.0
      %263 = vmatpush1.msra.mxu0 0.0
      %264 = vmatprep.subr.mxu0 0.0
      %265 = vmatpush1.msra.mxu0 0.0
      %266 = vmatprep.subr.mxu0 0.0
      %267 = vmatpush1.msra.mxu0 0.0
      %268 = vmatprep.subr.mxu0 0.0
      %269 = vmatpush1.msra.mxu0 0.0
      %270 = vmatprep.subr.mxu0 0.0
      %271 = vmatpush1.msra.mxu0 0.0
      %272 = vmatprep.subr.mxu0 0.0
      %273 = vmatpush1.msra.mxu0 0.0
      %274 = vmatprep.mubr.f32.mxu0 0.0
      %275 = vmatmul.mubr.f32.gmra.mrb[0].mxu0 %v208
      %v276 = vpop.f32.mrb[0].mxu0
      %v277 = vadd.f32 0.0, %v276
      %v278 = vpop.f32.mrb[0].mxu0
      %279 = vdwg.mxu0
      %v280 = vmax.f32 %v277, 0.0
      %v281 = vld [vmem:[%s2] sm:$0xff]
      %v282 = vld [vmem:[%s2 + $0x8] sm:$0xff]
      %v283 = vld [vmem:[%s2 + $0x10] sm:$0xff]
      %v284 = vld [vmem:[%s2 + $0x18] sm:$0xff]
      %v285 = vld [vmem:[%s2 + $0x20] sm:$0xff]
      %v286 = vld [vmem:[%s2 + $0x28] sm:$0xff]
      %v287 = vld [vmem:[%s2 + $0x30] sm:$0xff]
      %v288 = vld [vmem:[%s2 + $0x38] sm:$0xff]
      %v289 = vld [vmem:[%s2 + $0x40] sm:$0xff]
      %v290 = vld [vmem:[%s2 + $0x48] sm:$0xff]
      %v291 = vld [vmem:[%s2 + $0x50] sm:$0xff]
      %v292 = vld [vmem:[%s2 + $0x58] sm:$0xff]
      %v293 = vld [vmem:[%s2 + $0x60] sm:$0xff]
      %v294 = vld [vmem:[%s2 + $0x68] sm:$0xff]
      %v295 = vld [vmem:[%s2 + $0x70] sm:$0xff]
      %v296 = vld [vmem:[%s2 + $0x78] sm:$0xff]
      %297 = vmatprep.subr.mxu0 0.0
      %298 = vmatpush1.msra.mxu0 %v281
      %299 = vmatprep.subr.mxu0 0.0
      %300 = vmatpush1.msra.mxu0 %v282
      %301 = vmatprep.subr.mxu0 0.0
      %302 = vmatpush1.msra.mxu0 %v283
      %303 = vmatprep.subr.mxu0 0.0
      %304 = vmatpush1.msra.mxu0 %v284
      %305 = vmatprep.subr.mxu0 0.0
      %306 = vmatpush1.msra.mxu0 %v285
      %307 = vmatprep.subr.mxu0 0.0
      %308 = vmatpush1.msra.mxu0 %v286
      %309 = vmatprep.subr.mxu0 0.0
      %310 = vmatpush1.msra.mxu0 %v287
      %311 = vmatprep.subr.mxu0 0.0
      %312 = vmatpush1.msra.mxu0 %v288
      %313 = vmatprep.subr.mxu0 0.0
      %314 = vmatpush1.msra.mxu0 %v289
      %315 = vmatprep.subr.mxu0 0.0
      %316 = vmatpush1.msra.mxu0 %v290
      %317 = vmatprep.subr.mxu0 0.0
      %318 = vmatpush1.msra.mxu0 %v291
      %319 = vmatprep.subr.mxu0 0.0
      %320 = vmatpush1.msra.mxu0 %v292
      %321 = vmatprep.subr.mxu0 0.0
      %322 = vmatpush1.msra.mxu0 %v293
      %323 = vmatprep.subr.mxu0 0.0
      %324 = vmatpush1.msra.mxu0 %v294
      %325 = vmatprep.subr.mxu0 0.0
      %326 = vmatpush1.msra.mxu0 %v295
      %327 = vmatprep.subr.mxu0 0.0
      %328 = vmatpush1.msra.mxu0 %v296
      %329 = vmatprep.subr.mxu0 0.0
      %330 = vmatpush1.msra.mxu0 0.0
      %331 = vmatprep.subr.mxu0 0.0
      %332 = vmatpush1.msra.mxu0 0.0
      %333 = vmatprep.subr.mxu0 0.0
      %334 = vmatpush1.msra.mxu0 0.0
      %335 = vmatprep.subr.mxu0 0.0
      %336 = vmatpush1.msra.mxu0 0.0
      %337 = vmatprep.subr.mxu0 0.0
      %338 = vmatpush1.msra.mxu0 0.0
      %339 = vmatprep.subr.mxu0 0.0
      %340 = vmatpush1.msra.mxu0 0.0
      %341 = vmatprep.subr.mxu0 0.0
      %342 = vmatpush1.msra.mxu0 0.0
      %343 = vmatprep.subr.mxu0 0.0
      %344 = vmatpush1.msra.mxu0 0.0
      %345 = vmatprep.subr.mxu0 0.0
      %346 = vmatpush1.msra.mxu0 0.0
      %347 = vmatprep.subr.mxu0 0.0
      %348 = vmatpush1.msra.mxu0 0.0
      %349 = vmatprep.subr.mxu0 0.0
      %350 = vmatpush1.msra.mxu0 0.0
      %351 = vmatprep.subr.mxu0 0.0
      %352 = vmatpush1.msra.mxu0 0.0
      %353 = vmatprep.subr.mxu0 0.0
      %354 = vmatpush1.msra.mxu0 0.0
      %355 = vmatprep.subr.mxu0 0.0
      %356 = vmatpush1.msra.mxu0 0.0
      %357 = vmatprep.subr.mxu0 0.0
      %358 = vmatpush1.msra.mxu0 0.0
      %359 = vmatprep.subr.mxu0 0.0
      %360 = vmatpush1.msra.mxu0 0.0
      %361 = vmatprep.mubr.f32.mxu0 0.0
      %362 = vmatmul.mubr.f32.gmra.mrb[0].mxu0 %v280
      %v363 = vpop.f32.mrb[0].mxu0
      %v364 = vadd.f32 0.0, %v363
      %v365 = vpop.f32.mrb[0].mxu0
      %366 = vdwg.mxu0
      %v367 = vxor.u32 %v364, 2147483648
      %v368 = vmul.f32 %v367, 1.442695
      %v369 = vpow.pop %v368
      %v370 = vadd.f32 %v369, 1.0
      %v371 = vrcp.pop %v370
      %v372 = vmul.f32 1.0, %v371
      %v373 = vlaneseq
      %v374 = vshrl.u32 %v373, 7
      %v375 = vsub.s32 0, %v374
      %v376 = vrot.slane %v372, %v375
      %v377 = vmul.f32 %v171, %v376
      %v378 = vmul.f32 %v172, %v376
      %v379 = vmul.f32 %v173, %v376
      %v380 = vmul.f32 %v174, %v376
      %v381 = vmul.f32 %v175, %v376
      %v382 = vmul.f32 %v176, %v376
      %v383 = vmul.f32 %v177, %v376
      %v384 = vmul.f32 %v178, %v376
      %385 = vst.msk [vmem:[%s170] sm:$0xff] %vm179, %v377
      %386 = vst.msk [vmem:[%s170 + $0x8] sm:$0xff] %vm179, %v378
      %387 = vst.msk [vmem:[%s170 + $0x10] sm:$0xff] %vm179, %v379
      %388 = vst.msk [vmem:[%s170 + $0x18] sm:$0xff] %vm179, %v380
      %389 = vst.msk [vmem:[%s170 + $0x20] sm:$0xff] %vm179, %v381
      %390 = vst.msk [vmem:[%s170 + $0x28] sm:$0xff] %vm179, %v382
      %391 = vst.msk [vmem:[%s170 + $0x30] sm:$0xff] %vm179, %v383
      %392 = vst.msk [vmem:[%s170 + $0x38] sm:$0xff] %vm179, %v384
      %p393 = scmp.lt.s32.totalorder %s14, 1
      %s394 = scalar_select %p393, %s14, 1
      %s395 = smul.addr %s394, 8
      %s396 = smul.addr %s395, 8
      %s397 = scalar_lea.vmem %s3, %s396
      // Predicated region
      $region33: #{tpu_custom_call.1} parent=31 // pred_check
        %p398 = pneg %p100
      $region34: #{tpu_custom_call.1} parent=31 // pred_check_branch
        %400 = sbr.rel (%p398) target = $region36
      $region35: #{tpu_custom_call.1} parent=31 // pred_region
        _
      $region36: #{tpu_custom_call.1} parent=31 // pred_fallthru
        _
    $region32: #{tpu_custom_call.1} parent=5 // pred_fallthru
      _
    %p401 = scmp.le.s32.totalorder 2, %s9
    // Predicated region
    $region37: #{tpu_custom_call.1} parent=5 // pred_check
      %p402 = pneg %p401
    $region38: #{tpu_custom_call.1} parent=5 // pred_check_branch
      %404 = sbr.rel (%p402) target = $region40
    $region39: #{tpu_custom_call.1} parent=5 // pred_region
      %s405 = ssub.s32 %s9, 2
      // Predicated region
      $region41: #{tpu_custom_call.1} parent=39 // pred_check
        %p406 = pneg %p106
      $region42: #{tpu_custom_call.1} parent=39 // pred_check_branch
        %408 = sbr.rel (%p406) target = $region44
      $region43: #{tpu_custom_call.1} parent=39 // pred_region
        %p409 = scmp.lt.s32.totalorder %s15, 1
        %s410 = scalar_select %p409, %s15, 1
        %s411 = smul.addr %s410, 8
        %s412 = smul.addr %s411, 8
        %s413 = scalar_lea.vmem %s3, %s412
      $region44: #{tpu_custom_call.1} parent=39 // pred_fallthru
        _
    $region40: #{tpu_custom_call.1} parent=5 // pred_fallthru
      _
  $region6: #{tpu_custom_call.1} parent=0 // loop_footer
    %s13 = sadd.s32 1, %s9
  $region7: #{tpu_custom_call.1} parent=0 // loop_footer_branch
    %8 = sbr.rel target = $region3
  $region8: #{tpu_custom_call.1} parent=0 // loop_exit
    _

</llo_original>
